<compile_context>
chip_gen: v7x
topology: tpu7x:2x2x1
jax: 0.10.0
libtpu: 0.0.40
codegen_flags: <defaults>
</compile_context>

<pallas_src>
import jax
import jax.numpy as jnp
from jax import lax
from jax.experimental import pallas as pl
from jax.experimental.pallas import tpu as pltpu


def _round_up(x, m):
    return (x + m - 1) // m * m


# --------------------------------------------------------------------------- #
# Kernel
# --------------------------------------------------------------------------- #
def _rope_kernel(xq_ref, xk_ref, cos_ref, sin_ref, oq_ref, ok_ref):
    """out = x * cos_full + pair_swap(x) * sin_signed  (VPU + two cheap XLU rolls)."""
    ts, d = cos_ref.shape  # (seq_tile, head_dim), static at trace time

    # Even-lane mask within a pair (pairs are (2i, 2i+1)).  Pure iota, no loads.
    even = (lax.broadcasted_iota(jnp.int32, (ts, d), 1) & 1) == 0

    def apply(x_ref, o_ref):
        n_heads = x_ref.shape[-1] // d
        for h in range(n_heads):
            # Load tables inside the loop: keeps live ranges bounded (vld is cheap).
            cos = cos_ref[...]            # (ts, d) f32
            sin = sin_ref[...]            # -sin on even lanes, +sin on odd lanes
            x = x_ref[:, pl.ds(h * d, d)].astype(jnp.float32)
            x_next = pltpu.roll(x, d - 1, 1)           # x[k+1] -> lane k
            x_prev = pltpu.roll(x, 1, 1)               # x[k-1] -> lane k
            swapped = jnp.where(even, x_next, x_prev)  # (x1, x0, x3, x2, ...)
            o_ref[:, pl.ds(h * d, d)] = (x * cos + swapped * sin).astype(o_ref.dtype)

    apply(xq_ref, oq_ref)
    apply(xk_ref, ok_ref)


# --------------------------------------------------------------------------- #
# Table precompute (hoist out of the per-call path in a real model)
# --------------------------------------------------------------------------- #
def make_rope_tables(freqs_cis):
    """freqs_cis: complex (S, D//2) -> (cos_full, sin_signed), each f32 (S, D)."""
    S, Dh = freqs_cis.shape
    cos = jnp.real(freqs_cis).astype(jnp.float32)
    sin = jnp.imag(freqs_cis).astype(jnp.float32)
    cos_full = jnp.repeat(cos, 2, axis=-1)                            # [c0,c0,c1,c1,...]
    sin_signed = jnp.stack([-sin, sin], axis=-1).reshape(S, 2 * Dh)   # [-s0,+s0,-s1,+s1,...]
    return cos_full, sin_signed


# --------------------------------------------------------------------------- #
# Tiling heuristics
# --------------------------------------------------------------------------- #
_ACT_VMEM_BUDGET = 36 * 1024 * 1024   # double-buffered in+out activations
_VMEM_LIMIT = 48 * 1024 * 1024        # leaves headroom on v7x (64 MiB / TC)


def _pick_seq_tile(S, B, row_bytes, seq_tile):
    ts = min(seq_tile, S)
    if ts < S:
        ts = max(8, ts - ts % 8)               # block rule: multiple of 8 (or == S)
    # Shrink until 2(bufs) x 2(in+out) x ts x row_bytes fits the VMEM budget.
    while ts > 8 and 4 * ts * row_bytes > _ACT_VMEM_BUDGET:
        half = ts // 2
        ts = max(8, half - half % 8)
    # Keep both TensorCores busy on v7x: aim for >= 2 grid programs if possible.
    if B * pl.cdiv(S, ts) < 2 and S > 8:
        ts = max(8, _round_up(pl.cdiv(S, 2), 8))
    return ts


# --------------------------------------------------------------------------- #
# Wrappers
# --------------------------------------------------------------------------- #
def rope_pallas_with_tables(xq, xk, cos_full, sin_signed, *, seq_tile=256):
    """Apply interleaved rotary embeddings using precomputed (S, D) f32 tables.

    xq: (B, S, Hq, D), xk: (B, S, Hk, D).  Returns outputs with input shapes/dtypes.
    """
    B, S, Hq, D = xq.shape
    Bk, Sk, Hk, Dk = xk.shape
    assert (B, S, D) == (Bk, Sk, Dk), "xq/xk batch, seq, head_dim must match"
    assert D % 2 == 0, "head_dim must be even"
    assert cos_full.shape == (S, D) and sin_signed.shape == (S, D)

    itemsize = jnp.dtype(xq.dtype).itemsize
    row_bytes = (Hq + Hk) * D * itemsize
    ts = _pick_seq_tile(S, B, row_bytes, seq_tile)
    n_s = pl.cdiv(S, ts)   # ragged grid: Pallas masks the tail block (no jnp.pad/slice)

    # Free metadata reshapes: heads merged into the lane axis.
    xq3 = xq.reshape(B, S, Hq * D)
    xk3 = xk.reshape(B, S, Hk * D)

    def act_spec(hd):
        # (batch squeezed, seq tile, all heads*head_dim) -- lane-dense last dim.
        return pl.BlockSpec((None, ts, hd), lambda si, b: (b, si, 0))

    tbl_spec = pl.BlockSpec((ts, D), lambda si, b: (si, 0))

    oq3, ok3 = pl.pallas_call(
        _rope_kernel,
        out_shape=(
            jax.ShapeDtypeStruct((B, S, Hq * D), xq.dtype),
            jax.ShapeDtypeStruct((B, S, Hk * D), xk.dtype),
        ),
        grid_spec=pltpu.PrefetchScalarGridSpec(
            num_scalar_prefetch=0,
            grid=(n_s, B),   # batch innermost -> table blocks reused across the batch
            in_specs=[
                act_spec(Hq * D),   # xq tile
                act_spec(Hk * D),   # xk tile
                tbl_spec,           # cos_full
                tbl_spec,           # sin_signed
            ],
            out_specs=(act_spec(Hq * D), act_spec(Hk * D)),
        ),
        compiler_params=pltpu.CompilerParams(
            dimension_semantics=("parallel", "parallel"),
            vmem_limit_bytes=_VMEM_LIMIT,
        ),
    )(xq3, xk3, cos_full, sin_signed)

    return oq3.reshape(B, S, Hq, D), ok3.reshape(B, S, Hk, D)


def rope_pallas(xq, xk, freqs_cis, *, seq_tile=256):
    """Convenience wrapper taking complex freqs_cis (S, D//2).

    In a real model call make_rope_tables() once and use rope_pallas_with_tables().
    """
    cos_full, sin_signed = make_rope_tables(freqs_cis)
    return rope_pallas_with_tables(xq, xk, cos_full, sin_signed, seq_tile=seq_tile)


# --------------------------------------------------------------------------- #
# Pure-JAX reference (mirrors torch apply_rotary_emb, interleaved complex)
# --------------------------------------------------------------------------- #
def rope_ref(xq, xk, freqs_cis):
    def rot(x):
        B, S, H, D = x.shape
        xr = x.astype(jnp.float32).reshape(B, S, H, D // 2, 2)
        xc = jax.lax.complex(xr[..., 0], xr[..., 1])
        f = freqs_cis.reshape(1, S, 1, D // 2)
        xo = xc * f
        out = jnp.stack([jnp.real(xo), jnp.imag(xo)], axis=-1).reshape(B, S, H, D)
        return out.astype(x.dtype)
    return rot(xq), rot(xk)


if __name__ == "__main__":
    # Small LLaMA-like shapes: batch=2, seq=8, 4 query heads, 2 kv heads, head_dim=128.
    B, S, Hq, Hk, D = 2, 8, 4, 2, 128

    key = jax.random.PRNGKey(0)
    kq, kk = jax.random.split(key)
    xq = jax.random.normal(kq, (B, S, Hq, D), dtype=jnp.float32)
    xk = jax.random.normal(kk, (B, S, Hk, D), dtype=jnp.float32)

    # precompute_freqs_cis(dim=D, end=S, theta=10000.0)
    theta = 10000.0
    inv_freq = 1.0 / (theta ** (jnp.arange(0, D, 2, dtype=jnp.float32) / D))  # (D//2,)
    t = jnp.arange(S, dtype=jnp.float32)
    angles = jnp.outer(t, inv_freq)                                           # (S, D//2)
    freqs_cis = jax.lax.complex(jnp.cos(angles), jnp.sin(angles))             # complex64

    # Tables hoisted out of the per-call path, as a real model would do.
    cos_full, sin_signed = make_rope_tables(freqs_cis)

    # f32 I/O path
    oq, ok = rope_pallas_with_tables(xq, xk, cos_full, sin_signed)
    oq, ok = jax.block_until_ready((oq, ok))

    rq, rk = rope_ref(xq, xk, freqs_cis)
    assert oq.shape == xq.shape and ok.shape == xk.shape
    assert oq.dtype == xq.dtype and ok.dtype == xk.dtype
    assert jnp.allclose(oq, rq, atol=1e-4, rtol=1e-4), "xq_out mismatch vs reference"
    assert jnp.allclose(ok, rk, atol=1e-4, rtol=1e-4), "xk_out mismatch vs reference"

    # bf16 I/O path (halves HBM traffic on a bandwidth-bound kernel; f32 internally).
    oq_b, ok_b = rope_pallas(xq.astype(jnp.bfloat16), xk.astype(jnp.bfloat16), freqs_cis)
    oq_b, ok_b = jax.block_until_ready((oq_b, ok_b))
    assert oq_b.dtype == jnp.bfloat16 and ok_b.dtype == jnp.bfloat16
    assert jnp.allclose(oq_b.astype(jnp.float32), rq, atol=6e-2, rtol=6e-2)
    assert jnp.allclose(ok_b.astype(jnp.float32), rk, atol=6e-2, rtol=6e-2)

    print("KERNEL_OK")
</pallas_src>

<mosaic_0001>
module attributes {stable_mosaic.version = 11 : i64} {
  func.func @_rope_kernel(%arg0: i32, %arg1: i32, %arg2: memref<1x8x512xf32, #tpu.memory_space<vmem>>, %arg3: memref<1x8x256xf32, #tpu.memory_space<vmem>>, %arg4: memref<8x128xf32, #tpu.memory_space<vmem>>, %arg5: memref<8x128xf32, #tpu.memory_space<vmem>>, %arg6: memref<1x8x512xf32, #tpu.memory_space<vmem>>, %arg7: memref<1x8x256xf32, #tpu.memory_space<vmem>>) attributes {dimension_semantics = [#tpu.dimension_semantics<parallel>, #tpu.dimension_semantics<parallel>], iteration_bounds = array<i64: 1, 2>, scalar_prefetch = 0 : i64, scratch_operands = 0 : i64, tpu.core_type = #tpu.core_type<tc>, window_params = [{transform_indices = @transform_0, window_bounds = array<i64: 1, 8, 512>}, {transform_indices = @transform_1, window_bounds = array<i64: 1, 8, 256>}, {transform_indices = @transform_2, window_bounds = array<i64: 8, 128>}, {transform_indices = @transform_3, window_bounds = array<i64: 8, 128>}, {transform_indices = @transform_4, window_bounds = array<i64: 1, 8, 512>}, {transform_indices = @transform_5, window_bounds = array<i64: 1, 8, 256>}]} {
    %0 = tpu.iota {dimensions = array<i32: 1>} : vector<8x128xi32>
    %c1_i32 = arith.constant 1 : i32
    %1 = vector.broadcast %c1_i32 : i32 to vector<8x128xi32>
    %2 = arith.andi %0, %1 : vector<8x128xi32>
    %c0_i32 = arith.constant 0 : i32
    %3 = vector.broadcast %c0_i32 : i32 to vector<8x128xi32>
    %4 = arith.cmpi eq, %2, %3 : vector<8x128xi32>
    %c0 = arith.constant 0 : index
    %c0_0 = arith.constant 0 : index
    %5 = vector.load %arg4[%c0, %c0_0] : memref<8x128xf32, #tpu.memory_space<vmem>>, vector<8x128xf32>
    %c0_1 = arith.constant 0 : index
    %c0_2 = arith.constant 0 : index
    %6 = vector.load %arg5[%c0_1, %c0_2] : memref<8x128xf32, #tpu.memory_space<vmem>>, vector<8x128xf32>
    %c0_3 = arith.constant 0 : index
    %c0_4 = arith.constant 0 : index
    %c0_5 = arith.constant 0 : index
    %7 = vector.load %arg2[%c0_3, %c0_4, %c0_5] : memref<1x8x512xf32, #tpu.memory_space<vmem>>, vector<1x8x128xf32>
    %8 = vector.shape_cast %7 : vector<1x8x128xf32> to vector<8x128xf32>
    %c127_i32 = arith.constant 127 : i32
    %9 = tpu.dynamic_rotate %8 by %c127_i32 dim 1 : vector<8x128xf32>, i32 -> vector<8x128xf32>
    %c1_i32_6 = arith.constant 1 : i32
    %10 = tpu.dynamic_rotate %8 by %c1_i32_6 dim 1 : vector<8x128xf32>, i32 -> vector<8x128xf32>
    %11 = arith.select %4, %9, %10 : vector<8x128xi1>, vector<8x128xf32>
    %12 = arith.mulf %8, %5 : vector<8x128xf32>
    %13 = arith.mulf %11, %6 : vector<8x128xf32>
    %14 = arith.addf %12, %13 : vector<8x128xf32>
    %c0_7 = arith.constant 0 : index
    %c0_8 = arith.constant 0 : index
    %c0_9 = arith.constant 0 : index
    %15 = vector.load %arg6[%c0_7, %c0_8, %c0_9] : memref<1x8x512xf32, #tpu.memory_space<vmem>>, vector<1x8x128xf32>
    %16 = vector.shape_cast %15 : vector<1x8x128xf32> to vector<8x128xf32>
    %17 = vector.shape_cast %14 : vector<8x128xf32> to vector<1x8x128xf32>
    tpu.vector_store %arg6[%c0_7, %c0_8, %c0_9], %17 {strides = array<i32>} : memref<1x8x512xf32, #tpu.memory_space<vmem>>, vector<1x8x128xf32>,
    %c0_10 = arith.constant 0 : index
    %c0_11 = arith.constant 0 : index
    %18 = vector.load %arg4[%c0_10, %c0_11] : memref<8x128xf32, #tpu.memory_space<vmem>>, vector<8x128xf32>
    %c0_12 = arith.constant 0 : index
    %c0_13 = arith.constant 0 : index
    %19 = vector.load %arg5[%c0_12, %c0_13] : memref<8x128xf32, #tpu.memory_space<vmem>>, vector<8x128xf32>
    %c0_14 = arith.constant 0 : index
    %c0_15 = arith.constant 0 : index
    %c128 = arith.constant 128 : index
    %20 = vector.load %arg2[%c0_14, %c0_15, %c128] : memref<1x8x512xf32, #tpu.memory_space<vmem>>, vector<1x8x128xf32>
    %21 = vector.shape_cast %20 : vector<1x8x128xf32> to vector<8x128xf32>
    %c127_i32_16 = arith.constant 127 : i32
    %22 = tpu.dynamic_rotate %21 by %c127_i32_16 dim 1 : vector<8x128xf32>, i32 -> vector<8x128xf32>
    %c1_i32_17 = arith.constant 1 : i32
    %23 = tpu.dynamic_rotate %21 by %c1_i32_17 dim 1 : vector<8x128xf32>, i32 -> vector<8x128xf32>
    %24 = arith.select %4, %22, %23 : vector<8x128xi1>, vector<8x128xf32>
    %25 = arith.mulf %21, %18 : vector<8x128xf32>
    %26 = arith.mulf %24, %19 : vector<8x128xf32>
    %27 = arith.addf %25, %26 : vector<8x128xf32>
    %c0_18 = arith.constant 0 : index
    %c0_19 = arith.constant 0 : index
    %c128_20 = arith.constant 128 : index
    %28 = vector.load %arg6[%c0_18, %c0_19, %c128_20] : memref<1x8x512xf32, #tpu.memory_space<vmem>>, vector<1x8x128xf32>
    %29 = vector.shape_cast %28 : vector<1x8x128xf32> to vector<8x128xf32>
    %30 = vector.shape_cast %27 : vector<8x128xf32> to vector<1x8x128xf32>
    tpu.vector_store %arg6[%c0_18, %c0_19, %c128_20], %30 {strides = array<i32>} : memref<1x8x512xf32, #tpu.memory_space<vmem>>, vector<1x8x128xf32>,
    %c0_21 = arith.constant 0 : index
    %c0_22 = arith.constant 0 : index
    %31 = vector.load %arg4[%c0_21, %c0_22] : memref<8x128xf32, #tpu.memory_space<vmem>>, vector<8x128xf32>
    %c0_23 = arith.constant 0 : index
    %c0_24 = arith.constant 0 : index
    %32 = vector.load %arg5[%c0_23, %c0_24] : memref<8x128xf32, #tpu.memory_space<vmem>>, vector<8x128xf32>
    %c0_25 = arith.constant 0 : index
    %c0_26 = arith.constant 0 : index
    %c256 = arith.constant 256 : index
    %33 = vector.load %arg2[%c0_25, %c0_26, %c256] : memref<1x8x512xf32, #tpu.memory_space<vmem>>, vector<1x8x128xf32>
    %34 = vector.shape_cast %33 : vector<1x8x128xf32> to vector<8x128xf32>
    %c127_i32_27 = arith.constant 127 : i32
    %35 = tpu.dynamic_rotate %34 by %c127_i32_27 dim 1 : vector<8x128xf32>, i32 -> vector<8x128xf32>
    %c1_i32_28 = arith.constant 1 : i32
    %36 = tpu.dynamic_rotate %34 by %c1_i32_28 dim 1 : vector<8x128xf32>, i32 -> vector<8x128xf32>
    %37 = arith.select %4, %35, %36 : vector<8x128xi1>, vector<8x128xf32>
    %38 = arith.mulf %34, %31 : vector<8x128xf32>
    %39 = arith.mulf %37, %32 : vector<8x128xf32>
    %40 = arith.addf %38, %39 : vector<8x128xf32>
    %c0_29 = arith.constant 0 : index
    %c0_30 = arith.constant 0 : index
    %c256_31 = arith.constant 256 : index
    %41 = vector.load %arg6[%c0_29, %c0_30, %c256_31] : memref<1x8x512xf32, #tpu.memory_space<vmem>>, vector<1x8x128xf32>
    %42 = vector.shape_cast %41 : vector<1x8x128xf32> to vector<8x128xf32>
    %43 = vector.shape_cast %40 : vector<8x128xf32> to vector<1x8x128xf32>
    tpu.vector_store %arg6[%c0_29, %c0_30, %c256_31], %43 {strides = array<i32>} : memref<1x8x512xf32, #tpu.memory_space<vmem>>, vector<1x8x128xf32>,
    %c0_32 = arith.constant 0 : index
    %c0_33 = arith.constant 0 : index
    %44 = vector.load %arg4[%c0_32, %c0_33] : memref<8x128xf32, #tpu.memory_space<vmem>>, vector<8x128xf32>
    %c0_34 = arith.constant 0 : index
    %c0_35 = arith.constant 0 : index
    %45 = vector.load %arg5[%c0_34, %c0_35] : memref<8x128xf32, #tpu.memory_space<vmem>>, vector<8x128xf32>
    %c0_36 = arith.constant 0 : index
    %c0_37 = arith.constant 0 : index
    %c384 = arith.constant 384 : index
    %46 = vector.load %arg2[%c0_36, %c0_37, %c384] : memref<1x8x512xf32, #tpu.memory_space<vmem>>, vector<1x8x128xf32>
    %47 = vector.shape_cast %46 : vector<1x8x128xf32> to vector<8x128xf32>
    %c127_i32_38 = arith.constant 127 : i32
    %48 = tpu.dynamic_rotate %47 by %c127_i32_38 dim 1 : vector<8x128xf32>, i32 -> vector<8x128xf32>
    %c1_i32_39 = arith.constant 1 : i32
    %49 = tpu.dynamic_rotate %47 by %c1_i32_39 dim 1 : vector<8x128xf32>, i32 -> vector<8x128xf32>
    %50 = arith.select %4, %48, %49 : vector<8x128xi1>, vector<8x128xf32>
    %51 = arith.mulf %47, %44 : vector<8x128xf32>
    %52 = arith.mulf %50, %45 : vector<8x128xf32>
    %53 = arith.addf %51, %52 : vector<8x128xf32>
    %c0_40 = arith.constant 0 : index
    %c0_41 = arith.constant 0 : index
    %c384_42 = arith.constant 384 : index
    %54 = vector.load %arg6[%c0_40, %c0_41, %c384_42] : memref<1x8x512xf32, #tpu.memory_space<vmem>>, vector<1x8x128xf32>
    %55 = vector.shape_cast %54 : vector<1x8x128xf32> to vector<8x128xf32>
    %56 = vector.shape_cast %53 : vector<8x128xf32> to vector<1x8x128xf32>
    tpu.vector_store %arg6[%c0_40, %c0_41, %c384_42], %56 {strides = array<i32>} : memref<1x8x512xf32, #tpu.memory_space<vmem>>, vector<1x8x128xf32>,
    %c0_43 = arith.constant 0 : index
    %c0_44 = arith.constant 0 : index
    %57 = vector.load %arg4[%c0_43, %c0_44] : memref<8x128xf32, #tpu.memory_space<vmem>>, vector<8x128xf32>
    %c0_45 = arith.constant 0 : index
    %c0_46 = arith.constant 0 : index
    %58 = vector.load %arg5[%c0_45, %c0_46] : memref<8x128xf32, #tpu.memory_space<vmem>>, vector<8x128xf32>
    %c0_47 = arith.constant 0 : index
    %c0_48 = arith.constant 0 : index
    %c0_49 = arith.constant 0 : index
    %59 = vector.load %arg3[%c0_47, %c0_48, %c0_49] : memref<1x8x256xf32, #tpu.memory_space<vmem>>, vector<1x8x128xf32>
    %60 = vector.shape_cast %59 : vector<1x8x128xf32> to vector<8x128xf32>
    %c127_i32_50 = arith.constant 127 : i32
    %61 = tpu.dynamic_rotate %60 by %c127_i32_50 dim 1 : vector<8x128xf32>, i32 -> vector<8x128xf32>
    %c1_i32_51 = arith.constant 1 : i32
    %62 = tpu.dynamic_rotate %60 by %c1_i32_51 dim 1 : vector<8x128xf32>, i32 -> vector<8x128xf32>
    %63 = arith.select %4, %61, %62 : vector<8x128xi1>, vector<8x128xf32>
    %64 = arith.mulf %60, %57 : vector<8x128xf32>
    %65 = arith.mulf %63, %58 : vector<8x128xf32>
    %66 = arith.addf %64, %65 : vector<8x128xf32>
    %c0_52 = arith.constant 0 : index
    %c0_53 = arith.constant 0 : index
    %c0_54 = arith.constant 0 : index
    %67 = vector.load %arg7[%c0_52, %c0_53, %c0_54] : memref<1x8x256xf32, #tpu.memory_space<vmem>>, vector<1x8x128xf32>
    %68 = vector.shape_cast %67 : vector<1x8x128xf32> to vector<8x128xf32>
    %69 = vector.shape_cast %66 : vector<8x128xf32> to vector<1x8x128xf32>
    tpu.vector_store %arg7[%c0_52, %c0_53, %c0_54], %69 {strides = array<i32>} : memref<1x8x256xf32, #tpu.memory_space<vmem>>, vector<1x8x128xf32>,
    %c0_55 = arith.constant 0 : index
    %c0_56 = arith.constant 0 : index
    %70 = vector.load %arg4[%c0_55, %c0_56] : memref<8x128xf32, #tpu.memory_space<vmem>>, vector<8x128xf32>
    %c0_57 = arith.constant 0 : index
    %c0_58 = arith.constant 0 : index
    %71 = vector.load %arg5[%c0_57, %c0_58] : memref<8x128xf32, #tpu.memory_space<vmem>>, vector<8x128xf32>
    %c0_59 = arith.constant 0 : index
    %c0_60 = arith.constant 0 : index
    %c128_61 = arith.constant 128 : index
    %72 = vector.load %arg3[%c0_59, %c0_60, %c128_61] : memref<1x8x256xf32, #tpu.memory_space<vmem>>, vector<1x8x128xf32>
    %73 = vector.shape_cast %72 : vector<1x8x128xf32> to vector<8x128xf32>
    %c127_i32_62 = arith.constant 127 : i32
    %74 = tpu.dynamic_rotate %73 by %c127_i32_62 dim 1 : vector<8x128xf32>, i32 -> vector<8x128xf32>
    %c1_i32_63 = arith.constant 1 : i32
    %75 = tpu.dynamic_rotate %73 by %c1_i32_63 dim 1 : vector<8x128xf32>, i32 -> vector<8x128xf32>
    %76 = arith.select %4, %74, %75 : vector<8x128xi1>, vector<8x128xf32>
    %77 = arith.mulf %73, %70 : vector<8x128xf32>
    %78 = arith.mulf %76, %71 : vector<8x128xf32>
    %79 = arith.addf %77, %78 : vector<8x128xf32>
    %c0_64 = arith.constant 0 : index
    %c0_65 = arith.constant 0 : index
    %c128_66 = arith.constant 128 : index
    %80 = vector.load %arg7[%c0_64, %c0_65, %c128_66] : memref<1x8x256xf32, #tpu.memory_space<vmem>>, vector<1x8x128xf32>
    %81 = vector.shape_cast %80 : vector<1x8x128xf32> to vector<8x128xf32>
    %82 = vector.shape_cast %79 : vector<8x128xf32> to vector<1x8x128xf32>
    tpu.vector_store %arg7[%c0_64, %c0_65, %c128_66], %82 {strides = array<i32>} : memref<1x8x256xf32, #tpu.memory_space<vmem>>, vector<1x8x128xf32>,
    return
  }
  func.func @transform_0(%arg0: i32, %arg1: i32) -> (i32, i32, i32) {
    %c0_i32 = arith.constant 0 : i32
    %c0_i32_0 = arith.constant 0 : i32
    return %arg1, %arg0, %c0_i32 : i32, i32, i32
  }
  func.func @transform_1(%arg0: i32, %arg1: i32) -> (i32, i32, i32) {
    %c0_i32 = arith.constant 0 : i32
    %c0_i32_0 = arith.constant 0 : i32
    return %arg1, %arg0, %c0_i32 : i32, i32, i32
  }
  func.func @transform_2(%arg0: i32, %arg1: i32) -> (i32, i32) {
    %c0_i32 = arith.constant 0 : i32
    %c0_i32_0 = arith.constant 0 : i32
    return %arg0, %c0_i32 : i32, i32
  }
  func.func @transform_3(%arg0: i32, %arg1: i32) -> (i32, i32) {
    %c0_i32 = arith.constant 0 : i32
    %c0_i32_0 = arith.constant 0 : i32
    return %arg0, %c0_i32 : i32, i32
  }
  func.func @transform_4(%arg0: i32, %arg1: i32) -> (i32, i32, i32) {
    %c0_i32 = arith.constant 0 : i32
    %c0_i32_0 = arith.constant 0 : i32
    return %arg1, %arg0, %c0_i32 : i32, i32, i32
  }
  func.func @transform_5(%arg0: i32, %arg1: i32) -> (i32, i32, i32) {
    %c0_i32 = arith.constant 0 : i32
    %c0_i32_0 = arith.constant 0 : i32
    return %arg1, %arg0, %c0_i32 : i32, i32, i32
  }
}

</mosaic_0001>

<llo_original>
// kernel: tpu_custom_call.1
$region0: #{tpu_custom_call.1}
  #allocation0 [shape = 'u32[]', space=smem, size = 0x4, offset = 0x4, fixed_abs, tag = 'smem constant byte address 0x4 - core index']
  #allocation1 [shape = 'u32[144,128]{1,0:T(1,128)}', space=vmem, size = 0x12000, scoped, tag = 'internal scratch']
  %s0 = inlined_call_operand.hbm [shape: f32[2,8,512], index: 0, kind: input, shape index: {}]
  %s1 = inlined_call_operand.hbm [shape: f32[2,8,256], index: 1, kind: input, shape index: {}]
  %s2 = inlined_call_operand.hbm [shape: f32[8,128], index: 2, kind: input, shape index: {}]
  %s3 = inlined_call_operand.vmem [shape: f32[8,128], index: 3, kind: input, shape index: {}]
  %s4 = inlined_call_operand.hbm [shape: f32[2,8,512], index: 4, kind: output, shape index: {0}]
  %s5 = inlined_call_operand.hbm [shape: f32[2,8,256], index: 5, kind: output, shape index: {1}]
  %6 = xla_tuple %s4, %s5
  %s7 = sld [smem:[#allocation0]]
  $region69: #{tpu_custom_call.1} parent=0
    _
  %s9 = ssub.s32 1, %s7
  %s10 = scalar_select 0, %s9, %s7
  $region1: #{tpu_custom_call.1} parent=0
    #allocation2 [shape = 'u8[32768]{0}', space=vmem, size = 0x8000, scoped, tag = 'input window, operand 0']
    #allocation3 [shape = 's32[2]{0}', space=sflag, size = 0x8, scoped, tag = 'scoped memory for tpu_custom_call.1']
    #allocation4 [shape = 's32[2]{0}', space=sflag, size = 0x8, scoped, tag = 'scoped memory for tpu_custom_call.1']
    #allocation5 [shape = 'u8[16384]{0}', space=vmem, size = 0x4000, scoped, tag = 'input window, operand 1']
    #allocation6 [shape = 's32[2]{0}', space=sflag, size = 0x8, scoped, tag = 'scoped memory for tpu_custom_call.1']
    #allocation7 [shape = 'u8[4096]{0}', space=vmem, size = 0x1000, scoped, tag = 'input window, operand 2, single buffered']
    #allocation8 [shape = 'u8[32768]{0}', space=vmem, size = 0x8000, scoped, tag = 'output window, operand 0']
    #allocation9 [shape = 'u8[16384]{0}', space=vmem, size = 0x4000, scoped, tag = 'output window, operand 1']
    #allocation10 [shape = 's32[2]{0}', space=sflag, size = 0x8, scoped, tag = 'scoped memory for tpu_custom_call.1']
    %11 = vsyncpa [#allocation3], 0
    %s12 = scalar_lea.sflag [#allocation3], 1
    %13 = vsyncpa %s12, 0
    %14 = vsyncpa [#allocation6], 0
    %s15 = scalar_lea.sflag [#allocation6], 1
    %16 = vsyncpa %s15, 0
    %17 = vsyncpa [#allocation4], 0
    %s18 = scalar_lea.sflag [#allocation4], 1
    %19 = vsyncpa %s18, 0
    %20 = vsyncpa [#allocation10], 0
    %s21 = scalar_lea.sflag [#allocation10], 1
    %22 = vsyncpa %s21, 0
    loop: start=0, step=1, limit=4
    $region2: #{tpu_custom_call.1} parent=1 // loop_pre_header
      _
    $region3: #{tpu_custom_call.1} parent=1 // loop_header
      %s24 = sphi 0, %s28
      %p25 = scmp.ge.s32.totalorder %s24, 4
      %s31 = sphi 0, %s43
      %s32 = sphi 0, %s39
      %s33 = sphi 0, %s31
      %s34 = sphi 0, %s32
      %s35 = sphi 0, %s33
      %s36 = sphi 0, %s34
      %s48 = sphi 0, %s50
      %s51 = sphi 0, %s48
      %s52 = sphi 0, %s51
      %s68 = sphi 0, %s52
      %s76 = sphi 0, %s78
      %s79 = sphi 0, %s76
      %s80 = sphi 0, %s79
      %s96 = sphi 0, %s80
      %s102 = sphi 0, %s104
      %s105 = sphi 0, %s102
      %s106 = sphi 0, %s105
      %s122 = sphi 0, %s106
      %s128 = sphi 0, %s130
      %s131 = sphi 0, %s128
      %s132 = sphi 0, %s131
      %s148 = sphi 0, %s132
      %s156 = sphi 0, %s158
      %s159 = sphi 0, %s156
      %s160 = sphi 0, %s159
      %s176 = sphi 0, %s160
      %s184 = sphi 0, %s186
      %s187 = sphi 0, %s184
      %s188 = sphi 0, %s187
      %s204 = sphi 0, %s188
    $region4: #{tpu_custom_call.1} parent=1 // loop_header_branch
      %27 = sbr.rel (%p25) target = $region8
    $region5: #{tpu_custom_call.1} parent=1 // loop_body
      %s29 = ssub.s32 %s24, 1
      %s30 = ssub.s32 %s24, 2
      %s37 = sadd.s32 1, %s32
      %p38 = scmp.ge.s32.totalorder %s37, 2
      %s39 = scalar_select %p38, 0, %s37
      %s40 = sadd.s32 1, %s31
      %s41 = scalar_select %p38, %s40, %s31
      %p42 = scmp.ge.s32.totalorder %s41, 1
      %s43 = scalar_select %p42, 0, %s41
      %s44 = ssub.s32 %s32, %s39
      %s45 = ssub.s32 %s31, %s43
      %s46 = sor.u32 %s44, %s45
      %p47 = scmp.eq.s32.totalorder %s46, 0
      %s49 = sadd.s32 %s48, 1
      %s50 = scalar_select %p47, %s48, %s49
      %p53 = pneg %p47
      %p54 = scmp.eq.s32.totalorder %s24, 1
      %p55 = por %p53, %p54
      %p56 = scmp.ne.s32.totalorder %s48, %s51
      %p57 = scmp.eq.s32.totalorder %s24, 0
      %p58 = por %p56, %p57
      %p59 = scmp.ne.s32.totalorder %s48, %s51
      %p60 = scmp.eq.s32.totalorder %s29, 1
      %p61 = por %p59, %p60
      %p62 = scmp.ne.s32.totalorder %s51, %s52
      %p63 = scmp.eq.s32.totalorder %s29, 0
      %p64 = por %p62, %p63
      %p65 = scmp.ne.s32.totalorder %s51, %s52
      %p66 = scmp.eq.s32.totalorder %s30, 1
      %p67 = por %p65, %p66
      %p69 = scmp.ne.s32.totalorder %s52, %s68
      %p70 = scmp.eq.s32.totalorder %s30, 0
      %p71 = por %p69, %p70
      %s72 = ssub.s32 %s32, %s39
      %s73 = ssub.s32 %s31, %s43
      %s74 = sor.u32 %s72, %s73
      %p75 = scmp.eq.s32.totalorder %s74, 0
      %s77 = sadd.s32 %s76, 1
      %s78 = scalar_select %p75, %s76, %s77
      %p81 = pneg %p75
      %p82 = scmp.eq.s32.totalorder %s24, 1
      %p83 = por %p81, %p82
      %p84 = scmp.ne.s32.totalorder %s76, %s79
      %p85 = scmp.eq.s32.totalorder %s24, 0
      %p86 = por %p84, %p85
      %p87 = scmp.ne.s32.totalorder %s76, %s79
      %p88 = scmp.eq.s32.totalorder %s29, 1
      %p89 = por %p87, %p88
      %p90 = scmp.ne.s32.totalorder %s79, %s80
      %p91 = scmp.eq.s32.totalorder %s29, 0
      %p92 = por %p90, %p91
      %p93 = scmp.ne.s32.totalorder %s79, %s80
      %p94 = scmp.eq.s32.totalorder %s30, 1
      %p95 = por %p93, %p94
      %p97 = scmp.ne.s32.totalorder %s80, %s96
      %p98 = scmp.eq.s32.totalorder %s30, 0
      %p99 = por %p97, %p98
      %s100 = ssub.s32 %s31, %s43
      %p101 = scmp.eq.s32.totalorder %s100, 0
      %s103 = sadd.s32 %s102, 1
      %s104 = scalar_select %p101, %s102, %s103
      %p107 = pneg %p101
      %p108 = scmp.eq.s32.totalorder %s24, 1
      %p109 = por %p107, %p108
      %p110 = scmp.ne.s32.totalorder %s102, %s105
      %p111 = scmp.eq.s32.totalorder %s24, 0
      %p112 = por %p110, %p111
      %p113 = scmp.ne.s32.totalorder %s102, %s105
      %p114 = scmp.eq.s32.totalorder %s29, 1
      %p115 = por %p113, %p114
      %p116 = scmp.ne.s32.totalorder %s105, %s106
      %p117 = scmp.eq.s32.totalorder %s29, 0
      %p118 = por %p116, %p117
      %p119 = scmp.ne.s32.totalorder %s105, %s106
      %p120 = scmp.eq.s32.totalorder %s30, 1
      %p121 = por %p119, %p120
      %p123 = scmp.ne.s32.totalorder %s106, %s122
      %p124 = scmp.eq.s32.totalorder %s30, 0
      %p125 = por %p123, %p124
      %s126 = ssub.s32 %s31, %s43
      %p127 = scmp.eq.s32.totalorder %s126, 0
      %s129 = sadd.s32 %s128, 1
      %s130 = scalar_select %p127, %s128, %s129
      %p133 = pneg %p127
      %p134 = scmp.eq.s32.totalorder %s24, 1
      %p135 = por %p133, %p134
      %p136 = scmp.ne.s32.totalorder %s128, %s131
      %p137 = scmp.eq.s32.totalorder %s24, 0
      %p138 = por %p136, %p137
      %p139 = scmp.ne.s32.totalorder %s128, %s131
      %p140 = scmp.eq.s32.totalorder %s29, 1
      %p141 = por %p139, %p140
      %p142 = scmp.ne.s32.totalorder %s131, %s132
      %p143 = scmp.eq.s32.totalorder %s29, 0
      %p144 = por %p142, %p143
      %p145 = scmp.ne.s32.totalorder %s131, %s132
      %p146 = scmp.eq.s32.totalorder %s30, 1
      %p147 = por %p145, %p146
      %p149 = scmp.ne.s32.totalorder %s132, %s148
      %p150 = scmp.eq.s32.totalorder %s30, 0
      %p151 = por %p149, %p150
      %s152 = ssub.s32 %s32, %s39
      %s153 = ssub.s32 %s31, %s43
      %s154 = sor.u32 %s152, %s153
      %p155 = scmp.eq.s32.totalorder %s154, 0
      %s157 = sadd.s32 %s156, 1
      %s158 = scalar_select %p155, %s156, %s157
      %p161 = pneg %p155
      %p162 = scmp.eq.s32.totalorder %s24, 1
      %p163 = por %p161, %p162
      %p164 = scmp.ne.s32.totalorder %s156, %s159
      %p165 = scmp.eq.s32.totalorder %s24, 0
      %p166 = por %p164, %p165
      %p167 = scmp.ne.s32.totalorder %s156, %s159
      %p168 = scmp.eq.s32.totalorder %s29, 1
      %p169 = por %p167, %p168
      %p170 = scmp.ne.s32.totalorder %s159, %s160
      %p171 = scmp.eq.s32.totalorder %s29, 0
      %p172 = por %p170, %p171
      %p173 = scmp.ne.s32.totalorder %s159, %s160
      %p174 = scmp.eq.s32.totalorder %s30, 1
      %p175 = por %p173, %p174
      %p177 = scmp.ne.s32.totalorder %s160, %s176
      %p178 = scmp.eq.s32.totalorder %s30, 0
      %p179 = por %p177, %p178
      %s180 = ssub.s32 %s32, %s39
      %s181 = ssub.s32 %s31, %s43
      %s182 = sor.u32 %s180, %s181
      %p183 = scmp.eq.s32.totalorder %s182, 0
      %s185 = sadd.s32 %s184, 1
      %s186 = scalar_select %p183, %s184, %s185
      %p189 = pneg %p183
      %p190 = scmp.eq.s32.totalorder %s24, 1
      %p191 = por %p189, %p190
      %p192 = scmp.ne.s32.totalorder %s184, %s187
      %p193 = scmp.eq.s32.totalorder %s24, 0
      %p194 = por %p192, %p193
      %p195 = scmp.ne.s32.totalorder %s184, %s187
      %p196 = scmp.eq.s32.totalorder %s29, 1
      %p197 = por %p195, %p196
      %p198 = scmp.ne.s32.totalorder %s187, %s188
      %p199 = scmp.eq.s32.totalorder %s29, 0
      %p200 = por %p198, %p199
      %p201 = scmp.ne.s32.totalorder %s187, %s188
      %p202 = scmp.eq.s32.totalorder %s30, 1
      %p203 = por %p201, %p202
      %p205 = scmp.ne.s32.totalorder %s188, %s204
      %p206 = scmp.eq.s32.totalorder %s30, 0
      %p207 = por %p205, %p206
      %p208 = scmp.le.s32.totalorder 1, %s24
      %p209 = scmp.lt.s32.totalorder %s24, 3
      %p210 = pnand %p208, %p209
      %p211 = pneg %p210
      // Predicated region
      $region9: #{tpu_custom_call.1} parent=5 // pred_check
        _
      $region10: #{tpu_custom_call.1} parent=5 // pred_check_branch
        %213 = sbr.rel (%p210) target = $region12
      $region11: #{tpu_custom_call.1} parent=5 // pred_region
        %s214 = ssub.s32 %s24, 1
        // Predicated region
        $region13: #{tpu_custom_call.1} parent=11 // pred_check
          %p215 = pneg %p118
        $region14: #{tpu_custom_call.1} parent=11 // pred_check_branch
          %217 = sbr.rel (%p215) target = $region16
        $region15: #{tpu_custom_call.1} parent=11 // pred_region
          %s219 = ssub.s32 128, 128
          %220 = vsyncadd [#allocation6], %s219
          %s221 = smul.addr %s33, 128
          %s222 = scalar_lea.hbm %s2, %s221
          %s224 = sshll.u32 [#allocation7], 4
          %s225 = int_to_ptr.vmem [resolvable:$true] %s224
          %227 = dma.hbm_to_vmem [thread:$0]  %s222, 128, %s225, [#allocation6]
        $region16: #{tpu_custom_call.1} parent=11 // pred_fallthru
          _
        // Predicated region
        $region17: #{tpu_custom_call.1} parent=11 // pred_check
          %p228 = pneg %p144
        $region18: #{tpu_custom_call.1} parent=11 // pred_check_branch
          %230 = sbr.rel (%p228) target = $region20
        $region19: #{tpu_custom_call.1} parent=11 // pred_region
          %p231 = scmp.lt.s32.totalorder %s33, 0
          %s232 = scalar_select %p231, %s33, 0
          %s233 = smul.addr %s232, 8
          %s234 = scalar_lea.vmem %s3, %s233
        $region20: #{tpu_custom_call.1} parent=11 // pred_fallthru
          _
      $region12: #{tpu_custom_call.1} parent=5 // pred_fallthru
        _
      %p235 = scmp.lt.s32.totalorder %s24, 2
      // Predicated region
      $region21: #{tpu_custom_call.1} parent=5 // pred_check
        %p236 = pneg %p235
      $region22: #{tpu_custom_call.1} parent=5 // pred_check_branch
        %238 = sbr.rel (%p236) target = $region24
      $region23: #{tpu_custom_call.1} parent=5 // pred_region
        // Predicated region
        $region25: #{tpu_custom_call.1} parent=23 // pred_check
          %p239 = pneg %p58
        $region26: #{tpu_custom_call.1} parent=23 // pred_check_branch
          %241 = sbr.rel (%p239) target = $region28
        $region27: #{tpu_custom_call.1} parent=23 // pred_region
          %s242 = sand.u32 %s48, 1
          %s243 = scalar_lea.sflag [#allocation3], %s242
          %s244 = sand.u32 %s48, 1
          %s245 = smul.addr %s244, 32
          %s246 = scalar_lea.vmem [#allocation2], %s245
          %s248 = ssub.s32 512, 512
          %249 = vsyncadd %s243, %s248
          %s250 = smul.addr %s31, 4
          %s251 = smul.addr %s32, 4
          %s252 = sadd.s32 %s250, %s251
          %s253 = smul.addr %s252, 128
          %s254 = scalar_lea.hbm %s0, %s253
          %s256 = sshll.u32 %s246, 4
          %s257 = int_to_ptr.vmem [resolvable:$true] %s256
          %259 = dma.hbm_to_vmem [thread:$0]  %s254, 512, %s257, %s243
        $region28: #{tpu_custom_call.1} parent=23 // pred_fallthru
          _
        // Predicated region
        $region29: #{tpu_custom_call.1} parent=23 // pred_check
          %p260 = pneg %p86
        $region30: #{tpu_custom_call.1} parent=23 // pred_check_branch
          %262 = sbr.rel (%p260) target = $region32
        $region31: #{tpu_custom_call.1} parent=23 // pred_region
          %s263 = sand.u32 %s24, 1
          %s264 = scalar_lea.sflag [#allocation6], %s263
          %s265 = sand.u32 %s76, 1
          %s266 = smul.addr %s265, 16
          %s267 = scalar_lea.vmem [#allocation5], %s266
          %s269 = ssub.s32 256, 256
          %270 = vsyncadd %s264, %s269
          %s271 = smul.addr %s31, 2
          %s272 = smul.addr %s32, 2
          %s273 = sadd.s32 %s271, %s272
          %s274 = smul.addr %s273, 128
          %s275 = scalar_lea.hbm %s1, %s274
          %s277 = sshll.u32 %s267, 4
          %s278 = int_to_ptr.vmem [resolvable:$true] %s277
          %280 = dma.hbm_to_vmem [thread:$0]  %s275, 256, %s278, %s264
        $region32: #{tpu_custom_call.1} parent=23 // pred_fallthru
          _
      $region24: #{tpu_custom_call.1} parent=5 // pred_fallthru
        _
      %p281 = scmp.le.s32.totalorder 1, %s24
      %p282 = scmp.lt.s32.totalorder %s24, 3
      %p283 = pnand %p281, %p282
      %p284 = pneg %p283
      // Predicated region
      $region33: #{tpu_custom_call.1} parent=5 // pred_check
        _
      $region34: #{tpu_custom_call.1} parent=5 // pred_check_branch
        %286 = sbr.rel (%p283) target = $region36
      $region35: #{tpu_custom_call.1} parent=5 // pred_region
        %s287 = ssub.s32 %s24, 1
        %s288 = sand.u32 %s51, 1
        %s289 = scalar_lea.sflag [#allocation3], %s288
        %s290 = sand.u32 %s51, 1
        %s291 = smul.addr %s290, 32
        %s292 = scalar_lea.vmem [#allocation2], %s291
        // Predicated region
        $region37: #{tpu_custom_call.1} parent=35 // pred_check
          %p293 = pneg %p64
        $region38: #{tpu_custom_call.1} parent=35 // pred_check_branch
          %295 = sbr.rel (%p293) target = $region40
        $region39: #{tpu_custom_call.1} parent=35 // pred_region
          %296 = dma.done %s289, 512
        $region40: #{tpu_custom_call.1} parent=35 // pred_fallthru
          _
        %s297 = sand.u32 %s29, 1
        %s298 = scalar_lea.sflag [#allocation6], %s297
        %s299 = sand.u32 %s79, 1
        %s300 = smul.addr %s299, 16
        %s301 = scalar_lea.vmem [#allocation5], %s300
        // Predicated region
        $region41: #{tpu_custom_call.1} parent=35 // pred_check
          %p302 = pneg %p92
        $region42: #{tpu_custom_call.1} parent=35 // pred_check_branch
          %304 = sbr.rel (%p302) target = $region44
        $region43: #{tpu_custom_call.1} parent=35 // pred_region
          %305 = dma.done %s298, 256
        $region44: #{tpu_custom_call.1} parent=35 // pred_fallthru
          _
        // Predicated region
        $region45: #{tpu_custom_call.1} parent=35 // pred_check
          %p306 = pneg %p118
        $region46: #{tpu_custom_call.1} parent=35 // pred_check_branch
          %308 = sbr.rel (%p306) target = $region48
        $region47: #{tpu_custom_call.1} parent=35 // pred_region
          %309 = dma.done [#allocation6], 128
        $region48: #{tpu_custom_call.1} parent=35 // pred_fallthru
          _
        %s310 = sand.u32 %s51, 1
        %s311 = scalar_lea.sflag [#allocation3], %s310
        %s312 = sand.u32 %s51, 1
        %s313 = smul.addr %s312, 32
        %s314 = scalar_lea.vmem [#allocation2], %s313
        %p315 = pneg %p64
        %p316 = pneg %p61
        %s317 = sand.u32 %s29, 1
        %s318 = scalar_lea.sflag [#allocation6], %s317
        %s319 = sand.u32 %s79, 1
        %s320 = smul.addr %s319, 16
        %s321 = scalar_lea.vmem [#allocation5], %s320
        %p322 = pneg %p92
        %p323 = pneg %p89
        %p324 = pneg %p118
        %p325 = pneg %p115
        %p326 = scmp.lt.s32.totalorder %s33, 0
        %s327 = scalar_select %p326, %s33, 0
        %s328 = smul.addr %s327, 8
        %s329 = scalar_lea.vmem %s3, %s328
        %p330 = pneg %p144
        %p331 = pneg %p141
        %p332 = pneg %p172
        %p333 = pneg %p169
        %s334 = sand.u32 %s159, 1
        %s335 = scalar_lea.sflag [#allocation4], %s334
        %s336 = sand.u32 %s159, 1
        %s337 = smul.addr %s336, 32
        %s338 = scalar_lea.vmem [#allocation8], %s337
        %p339 = pneg %p200
        %p340 = pneg %p197
        %s341 = sand.u32 %s187, 1
        %s342 = scalar_lea.sflag [#allocation10], %s341
        %s343 = sand.u32 %s187, 1
        %s344 = smul.addr %s343, 16
        %s345 = scalar_lea.vmem [#allocation9], %s344
        %p346 = scmp.lt.s32.totalorder %s33, 0
        %s347 = scalar_select %p346, %s33, 0
        %s348 = smul.addr %s347, 8
        %s349 = scalar_lea.vmem %s3, %s348
        %v350 = vlaneseq
        %v351 = vand.u32 %v350, 127
        %v352 = vand.u32 %v351, 1
        %vm353 = vcmp.eq.s32.totalorder %v352, 0
        %v354 = vld [vmem:[#allocation7] sm:$0xff]
        %v355 = vld [vmem:[%s349] sm:$0xff]
        %v356 = vld [vmem:[%s292] sm:$0xff]
        %357 = vrot.lane.b32.xlu0 %v356, 127
        %v358 = vpop.permute.xlu0 %357
        %359 = vrot.lane.b32.xlu0 %v356, 1
        %v360 = vpop.permute.xlu0 %359
        %v361 = vsel %vm353, %v358, %v360
        %v362 = vmul.f32 %v356, %v354
        %v363 = vmul.f32 %v361, %v355
        %v364 = vadd.f32 %v362, %v363
        %365 = vst [vmem:[%s338] sm:$0xff] %v364
        %v366 = vld [vmem:[#allocation7] sm:$0xff]
        %v367 = vld [vmem:[%s349] sm:$0xff]
        %v368 = vld [vmem:[%s292 + $0x8] sm:$0xff]
        %369 = vrot.lane.b32.xlu0 %v368, 127
        %v370 = vpop.permute.xlu0 %369
        %371 = vrot.lane.b32.xlu0 %v368, 1
        %v372 = vpop.permute.xlu0 %371
        %v373 = vsel %vm353, %v370, %v372
        %v374 = vmul.f32 %v368, %v366
        %v375 = vmul.f32 %v373, %v367
        %v376 = vadd.f32 %v374, %v375
        %377 = vst [vmem:[%s338 + $0x8] sm:$0xff] %v376
        %v378 = vld [vmem:[#allocation7] sm:$0xff]
        %v379 = vld [vmem:[%s349] sm:$0xff]
        %v380 = vld [vmem:[%s292 + $0x10] sm:$0xff]
        %381 = vrot.lane.b32.xlu0 %v380, 127
        %v382 = vpop.permute.xlu0 %381
        %383 = vrot.lane.b32.xlu0 %v380, 1
        %v384 = vpop.permute.xlu0 %383
        %v385 = vsel %vm353, %v382, %v384
        %v386 = vmul.f32 %v380, %v378
        %v387 = vmul.f32 %v385, %v379
        %v388 = vadd.f32 %v386, %v387
        %389 = vst [vmem:[%s338 + $0x10] sm:$0xff] %v388
        %v390 = vld [vmem:[#allocation7] sm:$0xff]
        %v391 = vld [vmem:[%s349] sm:$0xff]
        %v392 = vld [vmem:[%s292 + $0x18] sm:$0xff]
        %393 = vrot.lane.b32.xlu0 %v392, 127
        %v394 = vpop.permute.xlu0 %393
        %395 = vrot.lane.b32.xlu0 %v392, 1
        %v396 = vpop.permute.xlu0 %395
        %v397 = vsel %vm353, %v394, %v396
        %v398 = vmul.f32 %v392, %v390
        %v399 = vmul.f32 %v397, %v391
        %v400 = vadd.f32 %v398, %v399
        %401 = vst [vmem:[%s338 + $0x18] sm:$0xff] %v400
        %v402 = vld [vmem:[#allocation7] sm:$0xff]
        %v403 = vld [vmem:[%s349] sm:$0xff]
        %v404 = vld [vmem:[%s301] sm:$0xff]
        %405 = vrot.lane.b32.xlu0 %v404, 127
        %v406 = vpop.permute.xlu0 %405
        %407 = vrot.lane.b32.xlu0 %v404, 1
        %v408 = vpop.permute.xlu0 %407
        %v409 = vsel %vm353, %v406, %v408
        %v410 = vmul.f32 %v404, %v402
        %v411 = vmul.f32 %v409, %v403
        %v412 = vadd.f32 %v410, %v411
        %413 = vst [vmem:[%s345] sm:$0xff] %v412
        %v414 = vld [vmem:[#allocation7] sm:$0xff]
        %v415 = vld [vmem:[%s349] sm:$0xff]
        %v416 = vld [vmem:[%s301 + $0x8] sm:$0xff]
        %417 = vrot.lane.b32.xlu0 %v416, 127
        %v418 = vpop.permute.xlu0 %417
        %419 = vrot.lane.b32.xlu0 %v416, 1
        %v420 = vpop.permute.xlu0 %419
        %v421 = vsel %vm353, %v418, %v420
        %v422 = vmul.f32 %v416, %v414
        %v423 = vmul.f32 %v421, %v415
        %v424 = vadd.f32 %v422, %v423
        %425 = vst [vmem:[%s345 + $0x8] sm:$0xff] %v424
        %s426 = sand.u32 %s159, 1
        %s427 = scalar_lea.sflag [#allocation4], %s426
        %s428 = sand.u32 %s159, 1
        %s429 = smul.addr %s428, 32
        %s430 = scalar_lea.vmem [#allocation8], %s429
        %s431 = sand.u32 %s187, 1
        %s432 = scalar_lea.sflag [#allocation10], %s431
        %s433 = sand.u32 %s187, 1
        %s434 = smul.addr %s433, 16
        %s435 = scalar_lea.vmem [#allocation9], %s434
        // Predicated region
        $region49: #{tpu_custom_call.1} parent=35 // pred_check
          %p436 = pneg %p169
        $region50: #{tpu_custom_call.1} parent=35 // pred_check_branch
          %438 = sbr.rel (%p436) target = $region52
        $region51: #{tpu_custom_call.1} parent=35 // pred_region
          %s440 = ssub.s32 512, 512
          %441 = vsyncadd %s427, %s440
          %s442 = smul.addr %s33, 4
          %s443 = smul.addr %s34, 4
          %s444 = sadd.s32 %s442, %s443
          %s445 = smul.addr %s444, 128
          %s446 = scalar_lea.hbm %s4, %s445
          %s448 = sshll.u32 %s430, 4
          %s449 = int_to_ptr.vmem [resolvable:$true] %s448
          %451 = dma.vmem_to_hbm [thread:$0]  %s449, 512, %s446, %s427
        $region52: #{tpu_custom_call.1} parent=35 // pred_fallthru
          _
        // Predicated region
        $region53: #{tpu_custom_call.1} parent=35 // pred_check
          %p452 = pneg %p197
        $region54: #{tpu_custom_call.1} parent=35 // pred_check_branch
          %454 = sbr.rel (%p452) target = $region56
        $region55: #{tpu_custom_call.1} parent=35 // pred_region
          %s456 = ssub.s32 256, 256
          %457 = vsyncadd %s432, %s456
          %s458 = smul.addr %s33, 2
          %s459 = smul.addr %s34, 2
          %s460 = sadd.s32 %s458, %s459
          %s461 = smul.addr %s460, 128
          %s462 = scalar_lea.hbm %s5, %s461
          %s464 = sshll.u32 %s435, 4
          %s465 = int_to_ptr.vmem [resolvable:$true] %s464
          %467 = dma.vmem_to_hbm [thread:$0]  %s465, 256, %s462, %s432
        $region56: #{tpu_custom_call.1} parent=35 // pred_fallthru
          _
      $region36: #{tpu_custom_call.1} parent=5 // pred_fallthru
        _
      %p468 = scmp.le.s32.totalorder 2, %s24
      // Predicated region
      $region57: #{tpu_custom_call.1} parent=5 // pred_check
        %p469 = pneg %p468
      $region58: #{tpu_custom_call.1} parent=5 // pred_check_branch
        %471 = sbr.rel (%p469) target = $region60
      $region59: #{tpu_custom_call.1} parent=5 // pred_region
        %s472 = ssub.s32 %s24, 2
        // Predicated region
        $region61: #{tpu_custom_call.1} parent=59 // pred_check
          %p473 = pneg %p175
        $region62: #{tpu_custom_call.1} parent=59 // pred_check_branch
          %475 = sbr.rel (%p473) target = $region64
        $region63: #{tpu_custom_call.1} parent=59 // pred_region
          %s476 = sand.u32 %s160, 1
          %s477 = scalar_lea.sflag [#allocation4], %s476
          %s478 = sand.u32 %s160, 1
          %s479 = smul.addr %s478, 32
          %s480 = scalar_lea.vmem [#allocation8], %s479
          %481 = dma.done %s477, 512
        $region64: #{tpu_custom_call.1} parent=59 // pred_fallthru
          _
        // Predicated region
        $region65: #{tpu_custom_call.1} parent=59 // pred_check
          %p482 = pneg %p203
        $region66: #{tpu_custom_call.1} parent=59 // pred_check_branch
          %484 = sbr.rel (%p482) target = $region68
        $region67: #{tpu_custom_call.1} parent=59 // pred_region
          %s485 = sand.u32 %s188, 1
          %s486 = scalar_lea.sflag [#allocation10], %s485
          %s487 = sand.u32 %s188, 1
          %s488 = smul.addr %s487, 16
          %s489 = scalar_lea.vmem [#allocation9], %s488
          %490 = dma.done %s486, 256
        $region68: #{tpu_custom_call.1} parent=59 // pred_fallthru
          _
      $region60: #{tpu_custom_call.1} parent=5 // pred_fallthru
        _
    $region6: #{tpu_custom_call.1} parent=1 // loop_footer
      %s28 = sadd.s32 1, %s24
    $region7: #{tpu_custom_call.1} parent=1 // loop_footer_branch
      %23 = sbr.rel target = $region3
    $region8: #{tpu_custom_call.1} parent=1 // loop_exit
      _
    %491 = vsyncpa [#allocation3], 1
    %s492 = scalar_lea.sflag [#allocation3], 1
    %493 = vsyncpa %s492, 1
    %494 = vsyncpa [#allocation6], 1
    %s495 = scalar_lea.sflag [#allocation6], 1
    %496 = vsyncpa %s495, 1
    %497 = vsyncpa [#allocation4], 1
    %s498 = scalar_lea.sflag [#allocation4], 1
    %499 = vsyncpa %s498, 1
    %500 = vsyncpa [#allocation10], 1
    %s501 = scalar_lea.sflag [#allocation10], 1
    %502 = vsyncpa %s501, 1

</llo_original>
